<compile_context>
chip_gen: v5e
topology: v5e:2x2
jax: 0.10.0
libtpu: 0.0.40
codegen_flags: <defaults>
</compile_context>

<pallas_src>
import functools

import jax
import jax.numpy as jnp
from jax import lax
from jax.experimental import pallas as pl
from jax.experimental.pallas import tpu as pltpu

LANES = 128


def _round_up(n, m):
    return ((n + m - 1) // m) * m


def _largest_divisor_leq(n, cap):
    for d in range(min(cap, n), 0, -1):
        if n % d == 0:
            return d
    return 1


def _choose_tiles(n):
    """Return (n_pad, tm, tk).

    Padding is 128-granular. Row tiles up to 512 with >=2 row tiles when
    possible (v7x megacore); K tiles up to 2048 so the double-buffered adj
    tile stays ~<=4 MiB. For large graphs a few extra 128-blocks of padding
    are allowed if that buys much larger (better-factoring) tiles.
    """
    nb0 = _round_up(max(n, 1), LANES) // LANES
    max_extra = nb0 // 12          # 0 for small graphs; ~8% worst case extra
    best = None
    for nb in range(nb0, nb0 + max_extra + 1):
        cap_m = min(4, nb // 2) if nb >= 2 else 1
        cap_m = max(cap_m, 1)
        tm_b = _largest_divisor_leq(nb, cap_m)
        cap_k = max(1, min(16, 64 // tm_b))     # tm*tk*2B <= 2 MiB
        tk_b = _largest_divisor_leq(nb, cap_k)
        score = tm_b * tk_b
        if best is None or score > best[0]:
            best = (score, nb, tm_b, tk_b)
        if score >= 16:                          # >=512 KiB adj tile: good enough
            break
    _, nb, tm_b, tk_b = best
    return nb * LANES, tm_b * LANES, tk_b * LANES


def _vmem_limit(nbytes):
    # Never below the scoped default; capped so the budget also fits v7x.
    return int(min(max(nbytes, 32 << 20), 48 << 20))


# ---------------------------------------------------------------------------
# Kernel 1: support = x @ W1  (row-tiled; x is cast to bf16 inside the kernel,
# so there is no wrapper-side cast pass over the features)
# ---------------------------------------------------------------------------
def _xw_kernel(x_ref, w_ref, o_ref):
    o_ref[...] = jnp.dot(
        x_ref[...].astype(w_ref.dtype), w_ref[...],
        preferred_element_type=jnp.float32,
    ).astype(o_ref.dtype)


def _xw_matmul(x, w, *, tm):
    n_pad, fin = x.shape
    fout = w.shape[1]
    vmem = _vmem_limit(
        2 * tm * fin * x.dtype.itemsize
        + 2 * fin * fout * 2 + 2 * tm * fout * 2 + (2 << 20)
    )
    return pl.pallas_call(
        _xw_kernel,
        out_shape=jax.ShapeDtypeStruct((n_pad, fout), jnp.bfloat16),
        grid_spec=pltpu.PrefetchScalarGridSpec(
            num_scalar_prefetch=0,
            grid=(n_pad // tm,),
            in_specs=[
                pl.BlockSpec((tm, fin), lambda i: (i, 0)),
                pl.BlockSpec((fin, fout), lambda i: (0, 0)),
            ],
            out_specs=pl.BlockSpec((tm, fout), lambda i: (i, 0)),
        ),
        compiler_params=pltpu.CompilerParams(
            dimension_semantics=("parallel",),
            vmem_limit_bytes=vmem,
        ),
    )(x, w)


# ---------------------------------------------------------------------------
# Kernel 2 (layer 1, fused head transform):
#   s2 = relu(adj @ s1 + b1) @ W2pad
# grid = (row tiles "parallel", K tiles "arbitrary"); adj tiled, s1 resident.
# ---------------------------------------------------------------------------
def _layer1_kernel(adj_ref, s_ref, b1_ref, w2_ref, o_ref, acc_ref):
    k = pl.program_id(1)

    @pl.when(k == 0)
    def _():
        acc_ref[...] = jnp.zeros_like(acc_ref)

    tk = adj_ref.shape[1]
    ks = pl.multiple_of(k * tk, tk)
    acc_ref[...] += jnp.dot(
        adj_ref[...], s_ref[pl.ds(ks, tk), :], preferred_element_type=jnp.float32
    )

    @pl.when(k == pl.num_programs(1) - 1)
    def _():
        h = jnp.maximum(acc_ref[...] + b1_ref[...], 0.0)      # relu(adj@s1 + b1)
        # Fused head transform: lane-dense (tm, 128) output, no h round-trip.
        o_ref[...] = jnp.dot(
            h.astype(w2_ref.dtype), w2_ref[...], preferred_element_type=jnp.float32
        ).astype(o_ref.dtype)


def _layer1(adj_p, s1, b1, w2_p, *, tm, tk):
    n_pad = adj_p.shape[0]
    hidden = s1.shape[1]
    ni, nk = n_pad // tm, n_pad // tk
    vmem = _vmem_limit(
        2 * tm * tk * 2                           # adj double buffer
        + 2 * n_pad * max(hidden, LANES) * 2      # resident support
        + 2 * tm * LANES * 2                      # output buffers
        + tm * LANES * 4 + (4 << 20)              # acc + headroom
    )
    flops = 2 * n_pad * n_pad * hidden + 2 * n_pad * hidden * LANES
    bytes_accessed = n_pad * n_pad * 2 + n_pad * hidden * 2 + n_pad * LANES * 2
    return pl.pallas_call(
        _layer1_kernel,
        out_shape=jax.ShapeDtypeStruct((n_pad, LANES), jnp.bfloat16),
        grid_spec=pltpu.PrefetchScalarGridSpec(
            num_scalar_prefetch=0,
            grid=(ni, nk),
            in_specs=[
                pl.BlockSpec((tm, tk), lambda i, k: (i, k)),         # adj tile
                pl.BlockSpec((n_pad, hidden), lambda i, k: (0, 0)),  # resident support
                pl.BlockSpec((1, hidden), lambda i, k: (0, 0)),      # b1
                pl.BlockSpec((hidden, LANES), lambda i, k: (0, 0)),  # W2 (lane-padded)
            ],
            out_specs=pl.BlockSpec((tm, LANES), lambda i, k: (i, 0)),
            scratch_shapes=[pltpu.VMEM((tm, hidden), jnp.float32)],
        ),
        compiler_params=pltpu.CompilerParams(
            dimension_semantics=("parallel", "arbitrary"),
            vmem_limit_bytes=vmem,
        ),
        cost_estimate=pl.CostEstimate(
            flops=flops, transcendentals=0, bytes_accessed=bytes_accessed
        ),
    )(adj_p, s1, b1, w2_p)


# ---------------------------------------------------------------------------
# Kernel 3 (layer 2 / head): out = log_softmax(adj @ s2 + b2, axis=1)
# Accumulates directly into the resident f32 output block; padded logit
# columns are masked to -inf before the reduce; lane-dense stores throughout.
# ---------------------------------------------------------------------------
def _layer2_kernel(adj_ref, s_ref, b2_ref, o_ref, *, n_class):
    k = pl.program_id(1)

    @pl.when(k == 0)
    def _():
        o_ref[...] = jnp.zeros_like(o_ref)

    tk = adj_ref.shape[1]
    ks = pl.multiple_of(k * tk, tk)
    o_ref[...] += jnp.dot(
        adj_ref[...], s_ref[pl.ds(ks, tk), :], preferred_element_type=jnp.float32
    )

    @pl.when(k == pl.num_programs(1) - 1)
    def _():
        logits = o_ref[...] + b2_ref[...]
        col = lax.broadcasted_iota(jnp.int32, logits.shape, 1)
        logits = jnp.where(col < n_class, logits, -jnp.inf)   # mask padded classes
        m = jnp.max(logits, axis=1, keepdims=True)
        z = logits - m
        lse = jnp.log(jnp.sum(jnp.exp(z), axis=1, keepdims=True))
        o_ref[...] = z - lse


def _layer2(adj_p, s2, b2_p, *, tm, tk, n_class):
    n_pad = adj_p.shape[0]
    ni, nk = n_pad // tm, n_pad // tk
    kernel = functools.partial(_layer2_kernel, n_class=n_class)
    vmem = _vmem_limit(
        2 * tm * tk * 2 + 2 * n_pad * LANES * 2 + 2 * tm * LANES * 4 + (4 << 20)
    )
    flops = 2 * n_pad * n_pad * LANES
    bytes_accessed = n_pad * n_pad * 2 + n_pad * LANES * 2 + n_pad * LANES * 4
    return pl.pallas_call(
        kernel,
        out_shape=jax.ShapeDtypeStruct((n_pad, LANES), jnp.float32),
        grid_spec=pltpu.PrefetchScalarGridSpec(
            num_scalar_prefetch=0,
            grid=(ni, nk),
            in_specs=[
                pl.BlockSpec((tm, tk), lambda i, k: (i, k)),        # adj tile
                pl.BlockSpec((n_pad, LANES), lambda i, k: (0, 0)),  # resident s2
                pl.BlockSpec((1, LANES), lambda i, k: (0, 0)),      # b2 (lane-padded)
            ],
            out_specs=pl.BlockSpec((tm, LANES), lambda i, k: (i, 0)),
        ),
        compiler_params=pltpu.CompilerParams(
            dimension_semantics=("parallel", "arbitrary"),
            vmem_limit_bytes=vmem,
        ),
        cost_estimate=pl.CostEstimate(
            flops=flops, transcendentals=n_pad * LANES,
            bytes_accessed=bytes_accessed,
        ),
    )(adj_p, s2, b2_p)


# ---------------------------------------------------------------------------
# One-time prep (pad + cast adj / params once, reuse across forward calls)
# ---------------------------------------------------------------------------
def prepare_gcn_inputs(adj, w1, b1, w2, b2):
    n = adj.shape[0]
    hidden = w1.shape[1]
    n_class = w2.shape[1]
    n_pad, tm, tk = _choose_tiles(n)
    adj_p = jnp.zeros((n_pad, n_pad), jnp.bfloat16).at[:n, :n].set(
        adj.astype(jnp.bfloat16)
    )
    w1b = w1.astype(jnp.bfloat16)
    b1r = b1.reshape(1, hidden).astype(jnp.float32)
    w2_p = jnp.zeros((hidden, LANES), jnp.bfloat16).at[:, :n_class].set(
        w2.astype(jnp.bfloat16)
    )
    b2_p = jnp.zeros((1, LANES), jnp.float32).at[0, :n_class].set(
        b2.astype(jnp.float32)
    )
    return dict(adj_p=adj_p, w1=w1b, b1=b1r, w2_p=w2_p, b2_p=b2_p,
                n=n, n_class=n_class, tm=tm, tk=tk)


# ---------------------------------------------------------------------------
# Full forward pass (inference)
# ---------------------------------------------------------------------------
@functools.partial(jax.jit, static_argnames=("n", "n_class", "tm", "tk"))
def gcn_forward(x, adj_p, w1, b1, w2_p, b2_p, *, n, n_class, tm, tk):
    n_pad = adj_p.shape[0]
    fin = x.shape[1]
    # TODO(synk): F.dropout(p=0.5) is identity at inference; no-op here.
    xp = jnp.zeros((n_pad, fin), x.dtype).at[:n].set(x)       # row pad only
    s1 = _xw_matmul(xp, w1, tm=tm)                            # (n_pad, hidden) bf16
    s2 = _layer1(adj_p, s1, b1, w2_p, tm=tm, tk=tk)           # relu(adj@s1+b1)@W2
    out = _layer2(adj_p, s2, b2_p, tm=tm, tk=tk, n_class=n_class)
    # Padded rows/cols of adj are zero, so real output rows are uncontaminated;
    # garbage padded rows/cols are sliced off here.
    return out[:n, :n_class]


# ---------------------------------------------------------------------------
# Reference (mirrors the kernel's bf16 casts) + init matching the PyTorch code
# ---------------------------------------------------------------------------
def gcn_reference(x, adj, w1, b1, w2, b2):
    f = lambda a: a.astype(jnp.bfloat16).astype(jnp.float32)
    xb, ab, w1b, w2b = f(x), f(adj), f(w1), f(w2)
    s1 = f(jnp.dot(xb, w1b))
    h = jnp.maximum(jnp.dot(ab, s1) + b1.reshape(1, -1), 0.0)
    s2 = f(jnp.dot(f(h), w2b))
    logits = jnp.dot(ab, s2) + b2.reshape(1, -1)
    return jax.nn.log_softmax(logits, axis=1)


def init_gcnconv_params(key, in_features, out_features):
    """Matches GCNConv.reset_parameters: U(-stdv, stdv), stdv = 1/sqrt(out)."""
    stdv = 1.0 / jnp.sqrt(jnp.float32(out_features))
    kw, kb = jax.random.split(key)
    w = jax.random.uniform(kw, (in_features, out_features), jnp.float32,
                           minval=-stdv, maxval=stdv)
    b = jax.random.uniform(kb, (out_features,), jnp.float32,
                           minval=-stdv, maxval=stdv)
    return w, b


if __name__ == "__main__":
    # Small synthetic problem: 16 nodes, 8 input features, 32 hidden, 4 classes.
    N, in_channels, out_channels, n_class = 16, 8, 32, 4

    key = jax.random.PRNGKey(0)
    kx, kadj, k1, k2 = jax.random.split(key, 4)

    # Node features.
    x = jax.random.normal(kx, (N, in_channels), jnp.float32)

    # Deterministic symmetric adjacency with self-loops, row-normalized
    # (stands in for the "adj" that torch.spmm consumes).
    a = (jax.random.uniform(kadj, (N, N)) < 0.2).astype(jnp.float32)
    a = jnp.maximum(a, a.T) + jnp.eye(N, dtype=jnp.float32)
    adj = a / jnp.sum(a, axis=1, keepdims=True)

    # Parameters (same init scheme as the PyTorch module).
    w1, b1 = init_gcnconv_params(k1, in_channels, out_channels)
    w2, b2 = init_gcnconv_params(k2, out_channels, n_class)

    # Pad/cast the adjacency and parameters ONCE; reuse across forward calls.
    prep = prepare_gcn_inputs(adj, w1, b1, w2, b2)
    jax.block_until_ready(prep["adj_p"])

    out = gcn_forward(
        x, prep["adj_p"], prep["w1"], prep["b1"], prep["w2_p"], prep["b2_p"],
        n=prep["n"], n_class=prep["n_class"], tm=prep["tm"], tk=prep["tk"],
    )
    jax.block_until_ready(out)

    # Sanity 1: log_softmax rows must sum (in prob space) to ~1.
    assert out.shape == (N, n_class)
    row_sums = jnp.sum(jnp.exp(out), axis=1)
    assert bool(jnp.all(jnp.abs(row_sums - 1.0) < 1e-3))

    # Sanity 2: matches a pure-JAX reference using the same bf16 casts.
    ref = gcn_reference(x, adj, w1, b1, w2, b2)
    assert bool(jnp.max(jnp.abs(out - ref)) < 1e-2)

    print("KERNEL_OK")
</pallas_src>

<mosaic_0001>
module attributes {stable_mosaic.version = 11 : i64} {
  func.func @_layer1_kernel(%arg0: i32, %arg1: i32, %arg2: memref<128x128xbf16, #tpu.memory_space<vmem>>, %arg3: memref<128x32xbf16, #tpu.memory_space<vmem>>, %arg4: memref<1x32xf32, #tpu.memory_space<vmem>>, %arg5: memref<32x128xbf16, #tpu.memory_space<vmem>>, %arg6: memref<128x128xbf16, #tpu.memory_space<vmem>>, %arg7: memref<128x32xf32, #tpu.memory_space<vmem>>) attributes {dimension_semantics = [#tpu.dimension_semantics<parallel>, #tpu.dimension_semantics<arbitrary>], iteration_bounds = array<i64: 1, 1>, scalar_prefetch = 0 : i64, scratch_operands = 1 : i64, tpu.core_type = #tpu.core_type<tc>, window_params = [{transform_indices = @transform_0, window_bounds = array<i64: 128, 128>}, {pipeline_mode = #tpu.pipeline_mode<synchronous>, transform_indices = @transform_1, window_bounds = array<i64: 128, 32>}, {pipeline_mode = #tpu.pipeline_mode<synchronous>, transform_indices = @transform_2, window_bounds = array<i64: 1, 32>}, {pipeline_mode = #tpu.pipeline_mode<synchronous>, transform_indices = @transform_3, window_bounds = array<i64: 32, 128>}, {transform_indices = @transform_4, window_bounds = array<i64: 128, 128>}]} {
    %c0_i32 = arith.constant 0 : i32
    %0 = arith.cmpi eq, %arg1, %c0_i32 : i32
    %1 = arith.extui %0 : i1 to i32
    %c0_i32_0 = arith.constant 0 : i32
    %2 = arith.cmpi ne, %1, %c0_i32_0 : i32
    scf.if %2 {
      %cst_9 = arith.constant 0.000000e+00 : f32
      %15 = vector.broadcast %cst_9 : f32 to vector<128x32xf32>
      %c0_10 = arith.constant 0 : index
      %c0_11 = arith.constant 0 : index
      %16 = vector.load %arg7[%c0_10, %c0_11] : memref<128x32xf32, #tpu.memory_space<vmem>>, vector<128x32xf32>
      tpu.vector_store %arg7[%c0_10, %c0_11], %15 {strides = array<i32>} : memref<128x32xf32, #tpu.memory_space<vmem>>, vector<128x32xf32>,
    } else {
    }
    %c128_i32 = arith.constant 128 : i32
    %3 = arith.muli %arg1, %c128_i32 : i32
    %4 = tpu.assume_multiple %3, 128 : i32
    %c0 = arith.constant 0 : index
    %c0_1 = arith.constant 0 : index
    %5 = vector.load %arg7[%c0, %c0_1] : memref<128x32xf32, #tpu.memory_space<vmem>>, vector<128x32xf32>
    %c0_2 = arith.constant 0 : index
    %c0_3 = arith.constant 0 : index
    %6 = vector.load %arg2[%c0_2, %c0_3] : memref<128x128xbf16, #tpu.memory_space<vmem>>, vector<128x128xbf16>
    %7 = arith.index_cast %4 : i32 to index
    %c0_4 = arith.constant 0 : index
    %8 = vector.load %arg3[%7, %c0_4] : memref<128x32xbf16, #tpu.memory_space<vmem>>, vector<128x32xbf16>
    %cst = arith.constant dense<0.000000e+00> : vector<128x32xf32>
    %9 = tpu.matmul %6, %8, %cst {dimension_numbers = #tpu.dot_dimension_numbers<[1], [0], [0], [1], [0, 0, 1, 1], [], []>} : vector<128x128xbf16>, vector<128x32xbf16>, vector<128x32xf32> -> vector<128x32xf32>
    %10 = arith.addf %5, %9 : vector<128x32xf32>
    %c0_5 = arith.constant 0 : index
    %c0_6 = arith.constant 0 : index
    %11 = vector.load %arg7[%c0_5, %c0_6] : memref<128x32xf32, #tpu.memory_space<vmem>>, vector<128x32xf32>
    tpu.vector_store %arg7[%c0_5, %c0_6], %10 {strides = array<i32>} : memref<128x32xf32, #tpu.memory_space<vmem>>, vector<128x32xf32>,
    %c0_i32_7 = arith.constant 0 : i32
    %12 = arith.cmpi eq, %arg1, %c0_i32_7 : i32
    %13 = arith.extui %12 : i1 to i32
    %c0_i32_8 = arith.constant 0 : i32
    %14 = arith.cmpi ne, %13, %c0_i32_8 : i32
    scf.if %14 {
      %c0_9 = arith.constant 0 : index
      %c0_10 = arith.constant 0 : index
      %15 = vector.load %arg7[%c0_9, %c0_10] : memref<128x32xf32, #tpu.memory_space<vmem>>, vector<128x32xf32>
      %c0_11 = arith.constant 0 : index
      %c0_12 = arith.constant 0 : index
      %16 = vector.load %arg4[%c0_11, %c0_12] : memref<1x32xf32, #tpu.memory_space<vmem>>, vector<1x32xf32>
      %17 = vector.broadcast %16 : vector<1x32xf32> to vector<128x32xf32>
      %18 = arith.addf %15, %17 : vector<128x32xf32>
      %cst_13 = arith.constant 0.000000e+00 : f32
      %19 = vector.broadcast %cst_13 : f32 to vector<128x32xf32>
      %20 = arith.maximumf %18, %19 : vector<128x32xf32>
      %21 = arith.truncf %20 : vector<128x32xf32> to vector<128x32xbf16>
      %c0_14 = arith.constant 0 : index
      %c0_15 = arith.constant 0 : index
      %22 = vector.load %arg5[%c0_14, %c0_15] : memref<32x128xbf16, #tpu.memory_space<vmem>>, vector<32x128xbf16>
      %cst_16 = arith.constant dense<0.000000e+00> : vector<128x128xf32>
      %23 = tpu.matmul %21, %22, %cst_16 {dimension_numbers = #tpu.dot_dimension_numbers<[1], [0], [0], [1], [0, 0, 1, 1], [], []>} : vector<128x32xbf16>, vector<32x128xbf16>, vector<128x128xf32> -> vector<128x128xf32>
      %24 = arith.truncf %23 : vector<128x128xf32> to vector<128x128xbf16>
      %c0_17 = arith.constant 0 : index
      %c0_18 = arith.constant 0 : index
      %25 = vector.load %arg6[%c0_17, %c0_18] : memref<128x128xbf16, #tpu.memory_space<vmem>>, vector<128x128xbf16>
      tpu.vector_store %arg6[%c0_17, %c0_18], %24 {strides = array<i32>} : memref<128x128xbf16, #tpu.memory_space<vmem>>, vector<128x128xbf16>,
    } else {
    }
    return
  }
  func.func @transform_0(%arg0: i32, %arg1: i32) -> (i32, i32) {
    %c0_i32 = arith.constant 0 : i32
    return %arg0, %arg1 : i32, i32
  }
  func.func @transform_1(%arg0: i32, %arg1: i32) -> (i32, i32) {
    %c0_i32 = arith.constant 0 : i32
    %c0_i32_0 = arith.constant 0 : i32
    %c0_i32_1 = arith.constant 0 : i32
    return %c0_i32, %c0_i32_0 : i32, i32
  }
  func.func @transform_2(%arg0: i32, %arg1: i32) -> (i32, i32) {
    %c0_i32 = arith.constant 0 : i32
    %c0_i32_0 = arith.constant 0 : i32
    %c0_i32_1 = arith.constant 0 : i32
    return %c0_i32, %c0_i32_0 : i32, i32
  }
  func.func @transform_3(%arg0: i32, %arg1: i32) -> (i32, i32) {
    %c0_i32 = arith.constant 0 : i32
    %c0_i32_0 = arith.constant 0 : i32
    %c0_i32_1 = arith.constant 0 : i32
    return %c0_i32, %c0_i32_0 : i32, i32
  }
  func.func @transform_4(%arg0: i32, %arg1: i32) -> (i32, i32) {
    %c0_i32 = arith.constant 0 : i32
    %c0_i32_0 = arith.constant 0 : i32
    return %arg0, %c0_i32 : i32, i32
  }
}

module attributes {stable_mosaic.version = 11 : i64} {
  func.func @_xw_kernel(%arg0: i32, %arg1: memref<128x8xf32, #tpu.memory_space<vmem>>, %arg2: memref<8x32xbf16, #tpu.memory_space<vmem>>, %arg3: memref<128x32xbf16, #tpu.memory_space<vmem>>) attributes {dimension_semantics = [#tpu.dimension_semantics<parallel>], iteration_bounds = array<i64: 1>, scalar_prefetch = 0 : i64, scratch_operands = 0 : i64, tpu.core_type = #tpu.core_type<tc>, window_params = [{transform_indices = @transform_0, window_bounds = array<i64: 128, 8>}, {pipeline_mode = #tpu.pipeline_mode<synchronous>, transform_indices = @transform_1, window_bounds = array<i64: 8, 32>}, {transform_indices = @transform_2, window_bounds = array<i64: 128, 32>}]} {
    %c0 = arith.constant 0 : index
    %c0_0 = arith.constant 0 : index
    %0 = vector.load %arg1[%c0, %c0_0] : memref<128x8xf32, #tpu.memory_space<vmem>>, vector<128x8xf32>
    %1 = arith.truncf %0 : vector<128x8xf32> to vector<128x8xbf16>
    %c0_1 = arith.constant 0 : index
    %c0_2 = arith.constant 0 : index
    %2 = vector.load %arg2[%c0_1, %c0_2] : memref<8x32xbf16, #tpu.memory_space<vmem>>, vector<8x32xbf16>
    %cst = arith.constant dense<0.000000e+00> : vector<128x32xf32>
    %3 = tpu.matmul %1, %2, %cst {dimension_numbers = #tpu.dot_dimension_numbers<[1], [0], [0], [1], [0, 0, 1, 1], [], []>} : vector<128x8xbf16>, vector<8x32xbf16>, vector<128x32xf32> -> vector<128x32xf32>
    %4 = arith.truncf %3 : vector<128x32xf32> to vector<128x32xbf16>
    %c0_3 = arith.constant 0 : index
    %c0_4 = arith.constant 0 : index
    %5 = vector.load %arg3[%c0_3, %c0_4] : memref<128x32xbf16, #tpu.memory_space<vmem>>, vector<128x32xbf16>
    tpu.vector_store %arg3[%c0_3, %c0_4], %4 {strides = array<i32>} : memref<128x32xbf16, #tpu.memory_space<vmem>>, vector<128x32xbf16>,
    return
  }
  func.func @transform_0(%arg0: i32) -> (i32, i32) {
    %c0_i32 = arith.constant 0 : i32
    %c0_i32_0 = arith.constant 0 : i32
    return %arg0, %c0_i32 : i32, i32
  }
  func.func @transform_1(%arg0: i32) -> (i32, i32) {
    %c0_i32 = arith.constant 0 : i32
    %c0_i32_0 = arith.constant 0 : i32
    %c0_i32_1 = arith.constant 0 : i32
    return %c0_i32, %c0_i32_0 : i32, i32
  }
  func.func @transform_2(%arg0: i32) -> (i32, i32) {
    %c0_i32 = arith.constant 0 : i32
    %c0_i32_0 = arith.constant 0 : i32
    return %arg0, %c0_i32 : i32, i32
  }
}

module attributes {stable_mosaic.version = 11 : i64} {
  func.func @_layer2_kernel(%arg0: i32, %arg1: i32, %arg2: memref<128x128xbf16, #tpu.memory_space<vmem>>, %arg3: memref<128x128xbf16, #tpu.memory_space<vmem>>, %arg4: memref<1x128xf32, #tpu.memory_space<vmem>>, %arg5: memref<128x128xf32, #tpu.memory_space<vmem>>) attributes {dimension_semantics = [#tpu.dimension_semantics<parallel>, #tpu.dimension_semantics<arbitrary>], iteration_bounds = array<i64: 1, 1>, scalar_prefetch = 0 : i64, scratch_operands = 0 : i64, tpu.core_type = #tpu.core_type<tc>, window_params = [{transform_indices = @transform_0, window_bounds = array<i64: 128, 128>}, {pipeline_mode = #tpu.pipeline_mode<synchronous>, transform_indices = @transform_1, window_bounds = array<i64: 128, 128>}, {pipeline_mode = #tpu.pipeline_mode<synchronous>, transform_indices = @transform_2, window_bounds = array<i64: 1, 128>}, {transform_indices = @transform_3, window_bounds = array<i64: 128, 128>}]} {
    %c0_i32 = arith.constant 0 : i32
    %0 = arith.cmpi eq, %arg1, %c0_i32 : i32
    %1 = arith.extui %0 : i1 to i32
    %c0_i32_0 = arith.constant 0 : i32
    %2 = arith.cmpi ne, %1, %c0_i32_0 : i32
    scf.if %2 {
      %cst_9 = arith.constant 0.000000e+00 : f32
      %15 = vector.broadcast %cst_9 : f32 to vector<128x128xf32>
      %c0_10 = arith.constant 0 : index
      %c0_11 = arith.constant 0 : index
      %16 = vector.load %arg5[%c0_10, %c0_11] : memref<128x128xf32, #tpu.memory_space<vmem>>, vector<128x128xf32>
      tpu.vector_store %arg5[%c0_10, %c0_11], %15 {strides = array<i32>} : memref<128x128xf32, #tpu.memory_space<vmem>>, vector<128x128xf32>,
    } else {
    }
    %c128_i32 = arith.constant 128 : i32
    %3 = arith.muli %arg1, %c128_i32 : i32
    %4 = tpu.assume_multiple %3, 128 : i32
    %c0 = arith.constant 0 : index
    %c0_1 = arith.constant 0 : index
    %5 = vector.load %arg5[%c0, %c0_1] : memref<128x128xf32, #tpu.memory_space<vmem>>, vector<128x128xf32>
    %c0_2 = arith.constant 0 : index
    %c0_3 = arith.constant 0 : index
    %6 = vector.load %arg2[%c0_2, %c0_3] : memref<128x128xbf16, #tpu.memory_space<vmem>>, vector<128x128xbf16>
    %7 = arith.index_cast %4 : i32 to index
    %c0_4 = arith.constant 0 : index
    %8 = vector.load %arg3[%7, %c0_4] : memref<128x128xbf16, #tpu.memory_space<vmem>>, vector<128x128xbf16>
    %cst = arith.constant dense<0.000000e+00> : vector<128x128xf32>
    %9 = tpu.matmul %6, %8, %cst {dimension_numbers = #tpu.dot_dimension_numbers<[1], [0], [0], [1], [0, 0, 1, 1], [], []>} : vector<128x128xbf16>, vector<128x128xbf16>, vector<128x128xf32> -> vector<128x128xf32>
    %10 = arith.addf %5, %9 : vector<128x128xf32>
    %c0_5 = arith.constant 0 : index
    %c0_6 = arith.constant 0 : index
    %11 = vector.load %arg5[%c0_5, %c0_6] : memref<128x128xf32, #tpu.memory_space<vmem>>, vector<128x128xf32>
    tpu.vector_store %arg5[%c0_5, %c0_6], %10 {strides = array<i32>} : memref<128x128xf32, #tpu.memory_space<vmem>>, vector<128x128xf32>,
    %c0_i32_7 = arith.constant 0 : i32
    %12 = arith.cmpi eq, %arg1, %c0_i32_7 : i32
    %13 = arith.extui %12 : i1 to i32
    %c0_i32_8 = arith.constant 0 : i32
    %14 = arith.cmpi ne, %13, %c0_i32_8 : i32
    scf.if %14 {
      %c0_9 = arith.constant 0 : index
      %c0_10 = arith.constant 0 : index
      %15 = vector.load %arg5[%c0_9, %c0_10] : memref<128x128xf32, #tpu.memory_space<vmem>>, vector<128x128xf32>
      %c0_11 = arith.constant 0 : index
      %c0_12 = arith.constant 0 : index
      %16 = vector.load %arg4[%c0_11, %c0_12] : memref<1x128xf32, #tpu.memory_space<vmem>>, vector<1x128xf32>
      %17 = vector.broadcast %16 : vector<1x128xf32> to vector<128x128xf32>
      %18 = arith.addf %15, %17 : vector<128x128xf32>
      %19 = tpu.iota {dimensions = array<i32: 1>} : vector<128x128xi32>
      %c4_i32 = arith.constant 4 : i32
      %20 = vector.broadcast %c4_i32 : i32 to vector<128x128xi32>
      %21 = arith.cmpi slt, %19, %20 : vector<128x128xi32>
      %cst_13 = arith.constant 0xFF800000 : f32
      %22 = vector.broadcast %cst_13 : f32 to vector<128x128xf32>
      %23 = arith.select %21, %18, %22 : vector<128x128xi1>, vector<128x128xf32>
      %cst_14 = arith.constant dense<0xFF800000> : vector<128xf32>
      %24 = vector.multi_reduction <maximumf>, %23, %cst_14 [1] : vector<128x128xf32> to vector<128xf32>
      %25 = vector.shape_cast %24 : vector<128xf32> to vector<128x1xf32>
      %26 = vector.broadcast %25 : vector<128x1xf32> to vector<128x128xf32>
      %27 = arith.subf %23, %26 : vector<128x128xf32>
      %28 = math.exp %27 : vector<128x128xf32>
      %cst_15 = arith.constant dense<0.000000e+00> : vector<128xf32>
      %29 = vector.multi_reduction <add>, %28, %cst_15 [1] : vector<128x128xf32> to vector<128xf32>
      %30 = vector.shape_cast %29 : vector<128xf32> to vector<128x1xf32>
      %31 = math.log %30 : vector<128x1xf32>
      %32 = vector.broadcast %31 : vector<128x1xf32> to vector<128x128xf32>
      %33 = arith.subf %27, %32 : vector<128x128xf32>
      %c0_16 = arith.constant 0 : index
      %c0_17 = arith.constant 0 : index
      %34 = vector.load %arg5[%c0_16, %c0_17] : memref<128x128xf32, #tpu.memory_space<vmem>>, vector<128x128xf32>
      tpu.vector_store %arg5[%c0_16, %c0_17], %33 {strides = array<i32>} : memref<128x128xf32, #tpu.memory_space<vmem>>, vector<128x128xf32>,
    } else {
    }
    return
  }
  func.func @transform_0(%arg0: i32, %arg1: i32) -> (i32, i32) {
    %c0_i32 = arith.constant 0 : i32
    return %arg0, %arg1 : i32, i32
  }
  func.func @transform_1(%arg0: i32, %arg1: i32) -> (i32, i32) {
    %c0_i32 = arith.constant 0 : i32
    %c0_i32_0 = arith.constant 0 : i32
    %c0_i32_1 = arith.constant 0 : i32
    return %c0_i32, %c0_i32_0 : i32, i32
  }
  func.func @transform_2(%arg0: i32, %arg1: i32) -> (i32, i32) {
    %c0_i32 = arith.constant 0 : i32
    %c0_i32_0 = arith.constant 0 : i32
    %c0_i32_1 = arith.constant 0 : i32
    return %c0_i32, %c0_i32_0 : i32, i32
  }
  func.func @transform_3(%arg0: i32, %arg1: i32) -> (i32, i32) {
    %c0_i32 = arith.constant 0 : i32
    %c0_i32_0 = arith.constant 0 : i32
    return %arg0, %c0_i32 : i32, i32
  }
}

</mosaic_0001>

<llo_original>
// kernel: gcn_forward.3
$region0: #{gcn_forward.3}
  #allocation0 [shape = 'u32[]', space=smem, size = 0x4, offset = 0x4, fixed_abs, tag = 'smem constant byte address 0x4 - core index']
  #allocation1 [shape = 'u32[72,128]{1,0:T(1,128)}', space=vmem, size = 0x9000, scoped, tag = 'internal scratch']
  %s0 = inlined_call_operand.vmem [shape: f32[128,8], index: 0, kind: input, shape index: {}]
  %s1 = inlined_call_operand.vmem [shape: bf16[8,32], index: 1, kind: input, shape index: {}]
  %s2 = inlined_call_operand.vmem [shape: bf16[128,32], index: 2, kind: output, shape index: {}]
  %s3 = sld [smem:[#allocation0]]
  $region18: #{gcn_forward.3} parent=0
    _
  %s5 = ssub.s32 1, %s3
  %s6 = scalar_select 0, %s5, %s3
  // Predicated region
  $region2: #{gcn_forward.3} parent=0 // pred_check
    _
  $region3: #{gcn_forward.3} parent=0 // pred_check_branch
    %8 = sbr.rel (0) target = $region5
  $region4: #{gcn_forward.3} parent=0 // pred_region
    _
  $region5: #{gcn_forward.3} parent=0 // pred_fallthru
    _
  // Predicated region
  $region6: #{gcn_forward.3} parent=0 // pred_check
    _
  $region7: #{gcn_forward.3} parent=0 // pred_check_branch
    %10 = sbr.rel (0) target = $region9
  $region8: #{gcn_forward.3} parent=0 // pred_region
    _
  $region9: #{gcn_forward.3} parent=0 // pred_fallthru
    _
  %v12 = vld [vmem:[%s0] sm:$0xff]
  %v13 = vld [vmem:[%s0 + $0x8] sm:$0xff]
  %v14 = vld [vmem:[%s0 + $0x10] sm:$0xff]
  %v15 = vld [vmem:[%s0 + $0x18] sm:$0xff]
  %v16 = vld [vmem:[%s0 + $0x20] sm:$0xff]
  %v17 = vld [vmem:[%s0 + $0x28] sm:$0xff]
  %v18 = vld [vmem:[%s0 + $0x30] sm:$0xff]
  %v19 = vld [vmem:[%s0 + $0x38] sm:$0xff]
  %v20 = vld [vmem:[%s0 + $0x40] sm:$0xff]
  %v21 = vld [vmem:[%s0 + $0x48] sm:$0xff]
  %v22 = vld [vmem:[%s0 + $0x50] sm:$0xff]
  %v23 = vld [vmem:[%s0 + $0x58] sm:$0xff]
  %v24 = vld [vmem:[%s0 + $0x60] sm:$0xff]
  %v25 = vld [vmem:[%s0 + $0x68] sm:$0xff]
  %v26 = vld [vmem:[%s0 + $0x70] sm:$0xff]
  %v27 = vld [vmem:[%s0 + $0x78] sm:$0xff]
  %v28 = vpack.c.bf16 %v13, %v12
  %v29 = vpack.c.bf16 %v15, %v14
  %v30 = vpack.c.bf16 %v17, %v16
  %v31 = vpack.c.bf16 %v19, %v18
  %v32 = vpack.c.bf16 %v21, %v20
  %v33 = vpack.c.bf16 %v23, %v22
  %v34 = vpack.c.bf16 %v25, %v24
  %v35 = vpack.c.bf16 %v27, %v26
  %v36 = vld [vmem:[%s1] sm:$0xf]
  %vm37 = vcmask 64512
  %v39 = vsel %vm37, %v28, 0
  %v42 = vsel %vm37, %v29, 0
  %v45 = vsel %vm37, %v30, 0
  %v48 = vsel %vm37, %v31, 0
  %v51 = vsel %vm37, %v32, 0
  %v54 = vsel %vm37, %v33, 0
  %v57 = vsel %vm37, %v34, 0
  %v60 = vsel %vm37, %v35, 0
  %vm62 = vcmask 1043456
  %v64 = vsel %vm62, %v36, 0
  %66 = vmatpush.bf16.msra.mxu0 0
  %67 = vmatpush.bf16.msra.mxu0 0
  %68 = vmatpush.bf16.msra.mxu0 0
  %69 = vmatpush.bf16.msra.mxu0 0
  %70 = vmatpush.bf16.msra.mxu0 0
  %71 = vmatpush.bf16.msra.mxu0 0
  %72 = vmatpush.bf16.msra.mxu0 0
  %73 = vmatpush.bf16.msra.mxu0 %v64
  %74 = vmatmul.bf16.gmra.mxu0 %v39
  %v75 = vpop.f32.mrf.mxu0
  %v76 = vadd.f32 0.0, %v75
  %v77 = vpop.f32.mrf.mxu0
  %v78 = vadd.f32 0.0, %v77
  %79 = vmatmul.bf16.gmra.mxu0 %v42
  %v80 = vpop.f32.mrf.mxu0
  %v81 = vadd.f32 0.0, %v80
  %v82 = vpop.f32.mrf.mxu0
  %v83 = vadd.f32 0.0, %v82
  %84 = vmatmul.bf16.gmra.mxu0 %v45
  %v85 = vpop.f32.mrf.mxu0
  %v86 = vadd.f32 0.0, %v85
  %v87 = vpop.f32.mrf.mxu0
  %v88 = vadd.f32 0.0, %v87
  %89 = vmatmul.bf16.gmra.mxu0 %v48
  %v90 = vpop.f32.mrf.mxu0
  %v91 = vadd.f32 0.0, %v90
  %v92 = vpop.f32.mrf.mxu0
  %v93 = vadd.f32 0.0, %v92
  %94 = vmatmul.bf16.gmra.mxu0 %v51
  %v95 = vpop.f32.mrf.mxu0
  %v96 = vadd.f32 0.0, %v95
  %v97 = vpop.f32.mrf.mxu0
  %v98 = vadd.f32 0.0, %v97
  %99 = vmatmul.bf16.gmra.mxu0 %v54
  %v100 = vpop.f32.mrf.mxu0
  %v101 = vadd.f32 0.0, %v100
  %v102 = vpop.f32.mrf.mxu0
  %v103 = vadd.f32 0.0, %v102
  %104 = vmatmul.bf16.gmra.mxu0 %v57
  %v105 = vpop.f32.mrf.mxu0
  %v106 = vadd.f32 0.0, %v105
  %v107 = vpop.f32.mrf.mxu0
  %v108 = vadd.f32 0.0, %v107
  %109 = vmatmul.bf16.gmra.mxu0 %v60
  %v110 = vpop.f32.mrf.mxu0
  %v111 = vadd.f32 0.0, %v110
  %v112 = vpop.f32.mrf.mxu0
  %v113 = vadd.f32 0.0, %v112
  %114 = vdwg.mxu0
  %v115 = vpack.c.bf16 %v76, %v76
  %v116 = vpack.c.bf16 %v78, %v78
  %v117 = vpack.c.bf16 %v81, %v81
  %v118 = vpack.c.bf16 %v83, %v83
  %v119 = vpack.c.bf16 %v86, %v86
  %v120 = vpack.c.bf16 %v88, %v88
  %v121 = vpack.c.bf16 %v91, %v91
  %v122 = vpack.c.bf16 %v93, %v93
  %v123 = vpack.c.bf16 %v96, %v96
  %v124 = vpack.c.bf16 %v98, %v98
  %v125 = vpack.c.bf16 %v101, %v101
  %v126 = vpack.c.bf16 %v103, %v103
  %v127 = vpack.c.bf16 %v106, %v106
  %v128 = vpack.c.bf16 %v108, %v108
  %v129 = vpack.c.bf16 %v111, %v111
  %v130 = vpack.c.bf16 %v113, %v113
  %vm131 = vcmask 257024
  %132 = vst.msk [vmem:[%s2] sm:$0xf] %vm131, %v115
  %133 = vst.msk [vmem:[%s2 + $0x4] sm:$0xf] %vm131, %v116
  %134 = vst.msk [vmem:[%s2 + $0x8] sm:$0xf] %vm131, %v117
  %135 = vst.msk [vmem:[%s2 + $0xc] sm:$0xf] %vm131, %v118
  %136 = vst.msk [vmem:[%s2 + $0x10] sm:$0xf] %vm131, %v119
  %137 = vst.msk [vmem:[%s2 + $0x14] sm:$0xf] %vm131, %v120
  %138 = vst.msk [vmem:[%s2 + $0x18] sm:$0xf] %vm131, %v121
  %139 = vst.msk [vmem:[%s2 + $0x1c] sm:$0xf] %vm131, %v122
  %140 = vst.msk [vmem:[%s2 + $0x20] sm:$0xf] %vm131, %v123
  %141 = vst.msk [vmem:[%s2 + $0x24] sm:$0xf] %vm131, %v124
  %142 = vst.msk [vmem:[%s2 + $0x28] sm:$0xf] %vm131, %v125
  %143 = vst.msk [vmem:[%s2 + $0x2c] sm:$0xf] %vm131, %v126
  %144 = vst.msk [vmem:[%s2 + $0x30] sm:$0xf] %vm131, %v127
  %145 = vst.msk [vmem:[%s2 + $0x34] sm:$0xf] %vm131, %v128
  %146 = vst.msk [vmem:[%s2 + $0x38] sm:$0xf] %vm131, %v129
  %147 = vst.msk [vmem:[%s2 + $0x3c] sm:$0xf] %vm131, %v130
  // Predicated region
  $region10: #{gcn_forward.3} parent=0 // pred_check
    _
  $region11: #{gcn_forward.3} parent=0 // pred_check_branch
    %149 = sbr.rel (0) target = $region13
  $region12: #{gcn_forward.3} parent=0 // pred_region
    _
  $region13: #{gcn_forward.3} parent=0 // pred_fallthru
    _
  // Predicated region
  $region14: #{gcn_forward.3} parent=0 // pred_check
    _
  $region15: #{gcn_forward.3} parent=0 // pred_check_branch
    %151 = sbr.rel (0) target = $region17
  $region16: #{gcn_forward.3} parent=0 // pred_region
    _
  $region17: #{gcn_forward.3} parent=0 // pred_fallthru
    _

// kernel: gcn_forward.4
$region0: #{gcn_forward.4}
  #allocation0 [shape = 'u32[]', space=smem, size = 0x4, offset = 0x4, fixed_abs, tag = 'smem constant byte address 0x4 - core index']
  #allocation1 [shape = 'u32[72,128]{1,0:T(1,128)}', space=vmem, size = 0x9000, scoped, tag = 'internal scratch']
  #allocation2 [shape = 'f32[128,32]{1,0:T(8,128)}', space=vmem, size = 0x10000, scoped, tag = 'scratch operand']
  %s0 = inlined_call_operand.vmem [shape: bf16[128,128], index: 0, kind: input, shape index: {}]
  %s1 = inlined_call_operand.vmem [shape: bf16[128,32], index: 1, kind: input, shape index: {}]
  %s2 = inlined_call_operand.vmem [shape: f32[1,32], index: 2, kind: input, shape index: {}]
  %s3 = inlined_call_operand.vmem [shape: bf16[32,128], index: 3, kind: input, shape index: {}]
  %s4 = inlined_call_operand.vmem [shape: bf16[128,128], index: 4, kind: output, shape index: {}]
  %s5 = sld [smem:[#allocation0]]
  $region34: #{gcn_forward.4} parent=0
    _
  %s7 = ssub.s32 1, %s5
  %s8 = scalar_select 0, %s7, %s5
  // Predicated region
  $region2: #{gcn_forward.4} parent=0 // pred_check
    _
  $region3: #{gcn_forward.4} parent=0 // pred_check_branch
    %10 = sbr.rel (0) target = $region5
  $region4: #{gcn_forward.4} parent=0 // pred_region
    _
  $region5: #{gcn_forward.4} parent=0 // pred_fallthru
    _
  // Predicated region
  $region6: #{gcn_forward.4} parent=0 // pred_check
    _
  $region7: #{gcn_forward.4} parent=0 // pred_check_branch
    %12 = sbr.rel (0) target = $region9
  $region8: #{gcn_forward.4} parent=0 // pred_region
    _
  $region9: #{gcn_forward.4} parent=0 // pred_fallthru
    _
  // Predicated region
  $region10: #{gcn_forward.4} parent=0 // pred_check
    _
  $region11: #{gcn_forward.4} parent=0 // pred_check_branch
    %14 = sbr.rel (0) target = $region13
  $region12: #{gcn_forward.4} parent=0 // pred_region
    _
  $region13: #{gcn_forward.4} parent=0 // pred_fallthru
    _
  // Predicated region
  $region14: #{gcn_forward.4} parent=0 // pred_check
    _
  $region15: #{gcn_forward.4} parent=0 // pred_check_branch
    %16 = sbr.rel (0) target = $region17
  $region16: #{gcn_forward.4} parent=0 // pred_region
    _
  $region17: #{gcn_forward.4} parent=0 // pred_fallthru
    _
  %p18 = scmp.eq.s32.totalorder 0, 0
  // Predicated region
  $region18: #{gcn_forward.4} parent=0 // pred_check
    %p19 = pneg %p18
  $region19: #{gcn_forward.4} parent=0 // pred_check_branch
    %21 = sbr.rel (%p19) target = $region21
  $region20: #{gcn_forward.4} parent=0 // pred_region
    %vm22 = vcmask 261120
    %23 = vst.msk [vmem:[#allocation2] sm:$0xff] %vm22, 0.0
    %24 = vst.msk [vmem:[#allocation2 + $0x8] sm:$0xff] %vm22, 0.0
    %25 = vst.msk [vmem:[#allocation2 + $0x10] sm:$0xff] %vm22, 0.0
    %26 = vst.msk [vmem:[#allocation2 + $0x18] sm:$0xff] %vm22, 0.0
    %27 = vst.msk [vmem:[#allocation2 + $0x20] sm:$0xff] %vm22, 0.0
    %28 = vst.msk [vmem:[#allocation2 + $0x28] sm:$0xff] %vm22, 0.0
    %29 = vst.msk [vmem:[#allocation2 + $0x30] sm:$0xff] %vm22, 0.0
    %30 = vst.msk [vmem:[#allocation2 + $0x38] sm:$0xff] %vm22, 0.0
    %31 = vst.msk [vmem:[#allocation2 + $0x40] sm:$0xff] %vm22, 0.0
    %32 = vst.msk [vmem:[#allocation2 + $0x48] sm:$0xff] %vm22, 0.0
    %33 = vst.msk [vmem:[#allocation2 + $0x50] sm:$0xff] %vm22, 0.0
    %34 = vst.msk [vmem:[#allocation2 + $0x58] sm:$0xff] %vm22, 0.0
    %35 = vst.msk [vmem:[#allocation2 + $0x60] sm:$0xff] %vm22, 0.0
    %36 = vst.msk [vmem:[#allocation2 + $0x68] sm:$0xff] %vm22, 0.0
    %37 = vst.msk [vmem:[#allocation2 + $0x70] sm:$0xff] %vm22, 0.0
    %38 = vst.msk [vmem:[#allocation2 + $0x78] sm:$0xff] %vm22, 0.0
  $region21: #{gcn_forward.4} parent=0 // pred_fallthru
    _
  %s39 = smul.u32 0, 128
  %v40 = vld [vmem:[#allocation2] sm:$0xff]
  %v41 = vld [vmem:[#allocation2 + $0x8] sm:$0xff]
  %v42 = vld [vmem:[#allocation2 + $0x10] sm:$0xff]
  %v43 = vld [vmem:[#allocation2 + $0x18] sm:$0xff]
  %v44 = vld [vmem:[#allocation2 + $0x20] sm:$0xff]
  %v45 = vld [vmem:[#allocation2 + $0x28] sm:$0xff]
  %v46 = vld [vmem:[#allocation2 + $0x30] sm:$0xff]
  %v47 = vld [vmem:[#allocation2 + $0x38] sm:$0xff]
  %v48 = vld [vmem:[#allocation2 + $0x40] sm:$0xff]
  %v49 = vld [vmem:[#allocation2 + $0x48] sm:$0xff]
  %v50 = vld [vmem:[#allocation2 + $0x50] sm:$0xff]
  %v51 = vld [vmem:[#allocation2 + $0x58] sm:$0xff]
  %v52 = vld [vmem:[#allocation2 + $0x60] sm:$0xff]
  %v53 = vld [vmem:[#allocation2 + $0x68] sm:$0xff]
  %v54 = vld [vmem:[#allocation2 + $0x70] sm:$0xff]
  %v55 = vld [vmem:[#allocation2 + $0x78] sm:$0xff]
  %v56 = vld [vmem:[%s0] sm:$0xf]
  %v57 = vld [vmem:[%s0 + $0x4] sm:$0xf]
  %v58 = vld [vmem:[%s0 + $0x8] sm:$0xf]
  %v59 = vld [vmem:[%s0 + $0xc] sm:$0xf]
  %v60 = vld [vmem:[%s0 + $0x10] sm:$0xf]
  %v61 = vld [vmem:[%s0 + $0x14] sm:$0xf]
  %v62 = vld [vmem:[%s0 + $0x18] sm:$0xf]
  %v63 = vld [vmem:[%s0 + $0x1c] sm:$0xf]
  %v64 = vld [vmem:[%s0 + $0x20] sm:$0xf]
  %v65 = vld [vmem:[%s0 + $0x24] sm:$0xf]
  %v66 = vld [vmem:[%s0 + $0x28] sm:$0xf]
  %v67 = vld [vmem:[%s0 + $0x2c] sm:$0xf]
  %v68 = vld [vmem:[%s0 + $0x30] sm:$0xf]
  %v69 = vld [vmem:[%s0 + $0x34] sm:$0xf]
  %v70 = vld [vmem:[%s0 + $0x38] sm:$0xf]
  %v71 = vld [vmem:[%s0 + $0x3c] sm:$0xf]
  %s72 = sshra.s32 %s39, 3
  %s73 = sand.u32 %s39, 7
  %s74 = smul.addr %s72, 4
  %s75 = scalar_lea.vmem %s1, %s74
  %v76 = vld [vmem:[%s75] sm:$0xf]
  %v77 = vld [vmem:[%s75 + $0x4] sm:$0xf]
  %v78 = vld [vmem:[%s75 + $0x8] sm:$0xf]
  %v79 = vld [vmem:[%s75 + $0xc] sm:$0xf]
  %v80 = vld [vmem:[%s75 + $0x10] sm:$0xf]
  %v81 = vld [vmem:[%s75 + $0x14] sm:$0xf]
  %v82 = vld [vmem:[%s75 + $0x18] sm:$0xf]
  %v83 = vld [vmem:[%s75 + $0x1c] sm:$0xf]
  %v84 = vld [vmem:[%s75 + $0x20] sm:$0xf]
  %v85 = vld [vmem:[%s75 + $0x24] sm:$0xf]
  %v86 = vld [vmem:[%s75 + $0x28] sm:$0xf]
  %v87 = vld [vmem:[%s75 + $0x2c] sm:$0xf]
  %v88 = vld [vmem:[%s75 + $0x30] sm:$0xf]
  %v89 = vld [vmem:[%s75 + $0x34] sm:$0xf]
  %v90 = vld [vmem:[%s75 + $0x38] sm:$0xf]
  %v91 = vld [vmem:[%s75 + $0x3c] sm:$0xf]
  %v108 = vunpack.c.l.b16 %v56
  %v109 = vunpack.c.l.b16 %v57
  %v110 = vunpack.c.l.b16 %v58
  %v111 = vunpack.c.l.b16 %v59
  %v112 = vunpack.c.l.b16 %v60
  %v113 = vunpack.c.l.b16 %v61
  %v114 = vunpack.c.l.b16 %v62
  %v115 = vunpack.c.l.b16 %v63
  %v116 = vunpack.c.l.b16 %v64
  %v117 = vunpack.c.l.b16 %v65
  %v118 = vunpack.c.l.b16 %v66
  %v119 = vunpack.c.l.b16 %v67
  %v120 = vunpack.c.l.b16 %v68
  %v121 = vunpack.c.l.b16 %v69
  %v122 = vunpack.c.l.b16 %v70
  %v123 = vunpack.c.l.b16 %v71
  %v124 = vpack.c.b16 %v109, %v108
  %v125 = vpack.c.b16 %v111, %v110
  %v126 = vpack.c.b16 %v113, %v112
  %v127 = vpack.c.b16 %v115, %v114
  %v128 = vpack.c.b16 %v117, %v116
  %v129 = vpack.c.b16 %v119, %v118
  %v130 = vpack.c.b16 %v121, %v120
  %v131 = vpack.c.b16 %v123, %v122
  %v156 = vunpack.c.l.b16 %v76
  %v157 = vunpack.c.l.b16 %v77
  %v158 = vunpack.c.l.b16 %v78
  %v159 = vunpack.c.l.b16 %v79
  %v160 = vunpack.c.l.b16 %v80
  %v161 = vunpack.c.l.b16 %v81
  %v162 = vunpack.c.l.b16 %v82
  %v163 = vunpack.c.l.b16 %v83
  %v164 = vunpack.c.l.b16 %v84
  %v165 = vunpack.c.l.b16 %v85
  %v166 = vunpack.c.l.b16 %v86
  %v167 = vunpack.c.l.b16 %v87
  %v168 = vunpack.c.l.b16 %v88
  %v169 = vunpack.c.l.b16 %v89
  %v170 = vunpack.c.l.b16 %v90
  %v171 = vunpack.c.l.b16 %v91
  %v172 = vpack.c.b16 %v157, %v156
  %v173 = vpack.c.b16 %v159, %v158
  %v174 = vpack.c.b16 %v161, %v160
  %v175 = vpack.c.b16 %v163, %v162
  %v176 = vpack.c.b16 %v165, %v164
  %v177 = vpack.c.b16 %v167, %v166
  %v178 = vpack.c.b16 %v169, %v168
  %v179 = vpack.c.b16 %v171, %v170
  %188 = vmatpush.bf16.msra.mxu0 %v179
  %189 = vmatpush.bf16.msra.mxu0 %v178
  %190 = vmatpush.bf16.msra.mxu0 %v177
  %191 = vmatpush.bf16.msra.mxu0 %v176
  %192 = vmatpush.bf16.msra.mxu0 %v175
  %193 = vmatpush.bf16.msra.mxu0 %v174
  %194 = vmatpush.bf16.msra.mxu0 %v173
  %195 = vmatpush.bf16.msra.mxu0 %v172
  %196 = vmatmul.bf16.gmra.mxu0 %v124
  %v197 = vpop.f32.mrf.mxu0
  %v198 = vadd.f32 0.0, %v197
  %v199 = vpop.f32.mrf.mxu0
  %v200 = vadd.f32 0.0, %v199
  %201 = vmatmul.bf16.gmra.mxu0 %v125
  %v202 = vpop.f32.mrf.mxu0
  %v203 = vadd.f32 0.0, %v202
  %v204 = vpop.f32.mrf.mxu0
  %v205 = vadd.f32 0.0, %v204
  %206 = vmatmul.bf16.gmra.mxu0 %v126
  %v207 = vpop.f32.mrf.mxu0
  %v208 = vadd.f32 0.0, %v207
  %v209 = vpop.f32.mrf.mxu0
  %v210 = vadd.f32 0.0, %v209
  %211 = vmatmul.bf16.gmra.mxu0 %v127
  %v212 = vpop.f32.mrf.mxu0
  %v213 = vadd.f32 0.0, %v212
  %v214 = vpop.f32.mrf.mxu0
  %v215 = vadd.f32 0.0, %v214
  %216 = vmatmul.bf16.gmra.mxu0 %v128
  %v217 = vpop.f32.mrf.mxu0
  %v218 = vadd.f32 0.0, %v217
  %v219 = vpop.f32.mrf.mxu0
  %v220 = vadd.f32 0.0, %v219
  %221 = vmatmul.bf16.gmra.mxu0 %v129
  %v222 = vpop.f32.mrf.mxu0
  %v223 = vadd.f32 0.0, %v222
  %v224 = vpop.f32.mrf.mxu0
  %v225 = vadd.f32 0.0, %v224
  %226 = vmatmul.bf16.gmra.mxu0 %v130
  %v227 = vpop.f32.mrf.mxu0
  %v228 = vadd.f32 0.0, %v227
  %v229 = vpop.f32.mrf.mxu0
  %v230 = vadd.f32 0.0, %v229
  %231 = vmatmul.bf16.gmra.mxu0 %v131
  %v232 = vpop.f32.mrf.mxu0
  %v233 = vadd.f32 0.0, %v232
  %v234 = vpop.f32.mrf.mxu0
  %v235 = vadd.f32 0.0, %v234
  %236 = vdwg.mxu0
  %v237 = vadd.f32 %v40, %v198
  %v238 = vadd.f32 %v41, %v200
  %v239 = vadd.f32 %v42, %v203
  %v240 = vadd.f32 %v43, %v205
  %v241 = vadd.f32 %v44, %v208
  %v242 = vadd.f32 %v45, %v210
  %v243 = vadd.f32 %v46, %v213
  %v244 = vadd.f32 %v47, %v215
  %v245 = vadd.f32 %v48, %v218
  %v246 = vadd.f32 %v49, %v220
  %v247 = vadd.f32 %v50, %v223
  %v248 = vadd.f32 %v51, %v225
  %v249 = vadd.f32 %v52, %v228
  %v250 = vadd.f32 %v53, %v230
  %v251 = vadd.f32 %v54, %v233
  %v252 = vadd.f32 %v55, %v235
  %vm253 = vcmask 261120
  %254 = vst.msk [vmem:[#allocation2] sm:$0xff] %vm253, %v237
  %255 = vst.msk [vmem:[#allocation2 + $0x8] sm:$0xff] %vm253, %v238
  %256 = vst.msk [vmem:[#allocation2 + $0x10] sm:$0xff] %vm253, %v239
  %257 = vst.msk [vmem:[#allocation2 + $0x18] sm:$0xff] %vm253, %v240
  %258 = vst.msk [vmem:[#allocation2 + $0x20] sm:$0xff] %vm253, %v241
  %259 = vst.msk [vmem:[#allocation2 + $0x28] sm:$0xff] %vm253, %v242
  %260 = vst.msk [vmem:[#allocation2 + $0x30] sm:$0xff] %vm253, %v243
  %261 = vst.msk [vmem:[#allocation2 + $0x38] sm:$0xff] %vm253, %v244
  %262 = vst.msk [vmem:[#allocation2 + $0x40] sm:$0xff] %vm253, %v245
  %263 = vst.msk [vmem:[#allocation2 + $0x48] sm:$0xff] %vm253, %v246
  %264 = vst.msk [vmem:[#allocation2 + $0x50] sm:$0xff] %vm253, %v247
  %265 = vst.msk [vmem:[#allocation2 + $0x58] sm:$0xff] %vm253, %v248
  %266 = vst.msk [vmem:[#allocation2 + $0x60] sm:$0xff] %vm253, %v249
  %267 = vst.msk [vmem:[#allocation2 + $0x68] sm:$0xff] %vm253, %v250
  %268 = vst.msk [vmem:[#allocation2 + $0x70] sm:$0xff] %vm253, %v251
  %269 = vst.msk [vmem:[#allocation2 + $0x78] sm:$0xff] %vm253, %v252
  // Predicated region
  $region22: #{gcn_forward.4} parent=0 // pred_check
    %p270 = pneg %p18
  $region23: #{gcn_forward.4} parent=0 // pred_check_branch
    %272 = sbr.rel (%p270) target = $region25
  $region24: #{gcn_forward.4} parent=0 // pred_region
    %v273 = vld [vmem:[#allocation2] sm:$0xff]
    %v274 = vld [vmem:[#allocation2 + $0x8] sm:$0xff]
    %v275 = vld [vmem:[#allocation2 + $0x10] sm:$0xff]
    %v276 = vld [vmem:[#allocation2 + $0x18] sm:$0xff]
    %v277 = vld [vmem:[#allocation2 + $0x20] sm:$0xff]
    %v278 = vld [vmem:[#allocation2 + $0x28] sm:$0xff]
    %v279 = vld [vmem:[#allocation2 + $0x30] sm:$0xff]
    %v280 = vld [vmem:[#allocation2 + $0x38] sm:$0xff]
    %v281 = vld [vmem:[#allocation2 + $0x40] sm:$0xff]
    %v282 = vld [vmem:[#allocation2 + $0x48] sm:$0xff]
    %v283 = vld [vmem:[#allocation2 + $0x50] sm:$0xff]
    %v284 = vld [vmem:[#allocation2 + $0x58] sm:$0xff]
    %v285 = vld [vmem:[#allocation2 + $0x60] sm:$0xff]
    %v286 = vld [vmem:[#allocation2 + $0x68] sm:$0xff]
    %v287 = vld [vmem:[#allocation2 + $0x70] sm:$0xff]
    %v288 = vld [vmem:[#allocation2 + $0x78] sm:$0xff]
    %v289 = vld [vmem:[%s2] sm:$0x1]
    %v291 = vperm.slane %v289, 0
    %v293 = vadd.f32 %v273, %v291
    %v294 = vadd.f32 %v274, %v291
    %v295 = vadd.f32 %v275, %v291
    %v296 = vadd.f32 %v276, %v291
    %v297 = vadd.f32 %v277, %v291
    %v298 = vadd.f32 %v278, %v291
    %v299 = vadd.f32 %v279, %v291
    %v300 = vadd.f32 %v280, %v291
    %v301 = vadd.f32 %v281, %v291
    %v302 = vadd.f32 %v282, %v291
    %v303 = vadd.f32 %v283, %v291
    %v304 = vadd.f32 %v284, %v291
    %v305 = vadd.f32 %v285, %v291
    %v306 = vadd.f32 %v286, %v291
    %v307 = vadd.f32 %v287, %v291
    %v308 = vadd.f32 %v288, %v291
    %v309 = vmax.f32 %v293, 0.0
    %v310 = vmax.f32 %v294, 0.0
    %v311 = vmax.f32 %v295, 0.0
    %v312 = vmax.f32 %v296, 0.0
    %v313 = vmax.f32 %v297, 0.0
    %v314 = vmax.f32 %v298, 0.0
    %v315 = vmax.f32 %v299, 0.0
    %v316 = vmax.f32 %v300, 0.0
    %v317 = vmax.f32 %v301, 0.0
    %v318 = vmax.f32 %v302, 0.0
    %v319 = vmax.f32 %v303, 0.0
    %v320 = vmax.f32 %v304, 0.0
    %v321 = vmax.f32 %v305, 0.0
    %v322 = vmax.f32 %v306, 0.0
    %v323 = vmax.f32 %v307, 0.0
    %v324 = vmax.f32 %v308, 0.0
    %v325 = vpack.c.bf16 %v310, %v309
    %v326 = vpack.c.bf16 %v312, %v311
    %v327 = vpack.c.bf16 %v314, %v313
    %v328 = vpack.c.bf16 %v316, %v315
    %v329 = vpack.c.bf16 %v318, %v317
    %v330 = vpack.c.bf16 %v320, %v319
    %v331 = vpack.c.bf16 %v322, %v321
    %v332 = vpack.c.bf16 %v324, %v323
    %v333 = vld [vmem:[%s3] sm:$0xf]
    %v334 = vld [vmem:[%s3 + $0x4] sm:$0xf]
    %v335 = vld [vmem:[%s3 + $0x8] sm:$0xf]
    %v336 = vld [vmem:[%s3 + $0xc] sm:$0xf]
    %v341 = vunpack.c.l.b16 %v333
    %v342 = vunpack.c.l.b16 %v334
    %v343 = vunpack.c.l.b16 %v335
    %v344 = vunpack.c.l.b16 %v336
    %v345 = vpack.c.b16 %v342, %v341
    %v346 = vpack.c.b16 %v344, %v343
    %v350 = vsel %vm253, %v325, 0
    %v353 = vsel %vm253, %v326, 0
    %v356 = vsel %vm253, %v327, 0
    %v359 = vsel %vm253, %v328, 0
    %v362 = vsel %vm253, %v329, 0
    %v365 = vsel %vm253, %v330, 0
    %v368 = vsel %vm253, %v331, 0
    %v371 = vsel %vm253, %v332, 0
    %373 = vmatpush.bf16.msra.mxu0 0
    %374 = vmatpush.bf16.msra.mxu0 0
    %375 = vmatpush.bf16.msra.mxu0 0
    %376 = vmatpush.bf16.msra.mxu0 0
    %377 = vmatpush.bf16.msra.mxu0 0
    %378 = vmatpush.bf16.msra.mxu0 0
    %379 = vmatpush.bf16.msra.mxu0 %v346
    %380 = vmatpush.bf16.msra.mxu0 %v345
    %381 = vmatmul.bf16.gmra.mxu0 %v350
    %v382 = vpop.f32.mrf.mxu0
    %v383 = vadd.f32 0.0, %v382
    %v384 = vpop.f32.mrf.mxu0
    %v385 = vadd.f32 0.0, %v384
    %386 = vmatmul.bf16.gmra.mxu0 %v353
    %v387 = vpop.f32.mrf.mxu0
    %v388 = vadd.f32 0.0, %v387
    %v389 = vpop.f32.mrf.mxu0
    %v390 = vadd.f32 0.0, %v389
    %391 = vmatmul.bf16.gmra.mxu0 %v356
    %v392 = vpop.f32.mrf.mxu0
    %v393 = vadd.f32 0.0, %v392
    %v394 = vpop.f32.mrf.mxu0
    %v395 = vadd.f32 0.0, %v394
    %396 = vmatmul.bf16.gmra.mxu0 %v359
    %v397 = vpop.f32.mrf.mxu0
    %v398 = vadd.f32 0.0, %v397
    %v399 = vpop.f32.mrf.mxu0
    %v400 = vadd.f32 0.0, %v399
    %401 = vmatmul.bf16.gmra.mxu0 %v362
    %v402 = vpop.f32.mrf.mxu0
    %v403 = vadd.f32 0.0, %v402
    %v404 = vpop.f32.mrf.mxu0
    %v405 = vadd.f32 0.0, %v404
    %406 = vmatmul.bf16.gmra.mxu0 %v365
    %v407 = vpop.f32.mrf.mxu0
    %v408 = vadd.f32 0.0, %v407
    %v409 = vpop.f32.mrf.mxu0
    %v410 = vadd.f32 0.0, %v409
    %411 = vmatmul.bf16.gmra.mxu0 %v368
    %v412 = vpop.f32.mrf.mxu0
    %v413 = vadd.f32 0.0, %v412
    %v414 = vpop.f32.mrf.mxu0
    %v415 = vadd.f32 0.0, %v414
    %416 = vmatmul.bf16.gmra.mxu0 %v371
    %v417 = vpop.f32.mrf.mxu0
    %v418 = vadd.f32 0.0, %v417
    %v419 = vpop.f32.mrf.mxu0
    %v420 = vadd.f32 0.0, %v419
    %421 = vdwg.mxu0
    %v422 = vpack.c.bf16 %v383, %v383
    %v423 = vpack.c.bf16 %v385, %v385
    %v424 = vpack.c.bf16 %v388, %v388
    %v425 = vpack.c.bf16 %v390, %v390
    %v426 = vpack.c.bf16 %v393, %v393
    %v427 = vpack.c.bf16 %v395, %v395
    %v428 = vpack.c.bf16 %v398, %v398
    %v429 = vpack.c.bf16 %v400, %v400
    %v430 = vpack.c.bf16 %v403, %v403
    %v431 = vpack.c.bf16 %v405, %v405
    %v432 = vpack.c.bf16 %v408, %v408
    %v433 = vpack.c.bf16 %v410, %v410
    %v434 = vpack.c.bf16 %v413, %v413
    %v435 = vpack.c.bf16 %v415, %v415
    %v436 = vpack.c.bf16 %v418, %v418
    %v437 = vpack.c.bf16 %v420, %v420
    %438 = vst [vmem:[%s4] sm:$0xf] %v422
    %439 = vst [vmem:[%s4 + $0x4] sm:$0xf] %v423
    %440 = vst [vmem:[%s4 + $0x8] sm:$0xf] %v424
    %441 = vst [vmem:[%s4 + $0xc] sm:$0xf] %v425
    %442 = vst [vmem:[%s4 + $0x10] sm:$0xf] %v426
    %443 = vst [vmem:[%s4 + $0x14] sm:$0xf] %v427
    %444 = vst [vmem:[%s4 + $0x18] sm:$0xf] %v428
    %445 = vst [vmem:[%s4 + $0x1c] sm:$0xf] %v429
    %446 = vst [vmem:[%s4 + $0x20] sm:$0xf] %v430
    %447 = vst [vmem:[%s4 + $0x24] sm:$0xf] %v431
    %448 = vst [vmem:[%s4 + $0x28] sm:$0xf] %v432
    %449 = vst [vmem:[%s4 + $0x2c] sm:$0xf] %v433
    %450 = vst [vmem:[%s4 + $0x30] sm:$0xf] %v434
    %451 = vst [vmem:[%s4 + $0x34] sm:$0xf] %v435
    %452 = vst [vmem:[%s4 + $0x38] sm:$0xf] %v436
    %453 = vst [vmem:[%s4 + $0x3c] sm:$0xf] %v437
  $region25: #{gcn_forward.4} parent=0 // pred_fallthru
    _
  // Predicated region
  $region26: #{gcn_forward.4} parent=0 // pred_check
    _
  $region27: #{gcn_forward.4} parent=0 // pred_check_branch
    %455 = sbr.rel (0) target = $region29
  $region28: #{gcn_forward.4} parent=0 // pred_region
    _
  $region29: #{gcn_forward.4} parent=0 // pred_fallthru
    _
  // Predicated region
  $region30: #{gcn_forward.4} parent=0 // pred_check
    _
  $region31: #{gcn_forward.4} parent=0 // pred_check_branch
    %457 = sbr.rel (0) target = $region33
  $region32: #{gcn_forward.4} parent=0 // pred_region
    _
  $region33: #{gcn_forward.4} parent=0 // pred_fallthru
    _

// kernel: gcn_forward.5
$region0: #{gcn_forward.5}
  #allocation0 [shape = 'u32[]', space=smem, size = 0x4, offset = 0x4, fixed_abs, tag = 'smem constant byte address 0x4 - core index']
  #allocation1 [shape = 'u32[72,128]{1,0:T(1,128)}', space=vmem, size = 0x9000, scoped, tag = 'internal scratch']
  %s0 = inlined_call_operand.vmem [shape: bf16[128,128], index: 0, kind: input, shape index: {}]
  %s1 = inlined_call_operand.vmem [shape: bf16[128,128], index: 1, kind: input, shape index: {}]
  %s2 = inlined_call_operand.vmem [shape: f32[1,128], index: 2, kind: input, shape index: {}]
  %s3 = inlined_call_operand.vmem [shape: f32[128,128], index: 3, kind: output, shape index: {}]
  %s4 = sld [smem:[#allocation0]]
  $region30: #{gcn_forward.5} parent=0
    _
  %s6 = ssub.s32 1, %s4
  %s7 = scalar_select 0, %s6, %s4
  // Predicated region
  $region2: #{gcn_forward.5} parent=0 // pred_check
    _
  $region3: #{gcn_forward.5} parent=0 // pred_check_branch
    %9 = sbr.rel (0) target = $region5
  $region4: #{gcn_forward.5} parent=0 // pred_region
    _
  $region5: #{gcn_forward.5} parent=0 // pred_fallthru
    _
  // Predicated region
  $region6: #{gcn_forward.5} parent=0 // pred_check
    _
  $region7: #{gcn_forward.5} parent=0 // pred_check_branch
    %11 = sbr.rel (0) target = $region9
  $region8: #{gcn_forward.5} parent=0 // pred_region
    _
  $region9: #{gcn_forward.5} parent=0 // pred_fallthru
    _
  // Predicated region
  $region10: #{gcn_forward.5} parent=0 // pred_check
    _
  $region11: #{gcn_forward.5} parent=0 // pred_check_branch
    %13 = sbr.rel (0) target = $region13
  $region12: #{gcn_forward.5} parent=0 // pred_region
    _
  $region13: #{gcn_forward.5} parent=0 // pred_fallthru
    _
  %p14 = scmp.eq.s32.totalorder 0, 0
  // Predicated region
  $region14: #{gcn_forward.5} parent=0 // pred_check
    %p15 = pneg %p14
  $region15: #{gcn_forward.5} parent=0 // pred_check_branch
    %17 = sbr.rel (%p15) target = $region17
  $region16: #{gcn_forward.5} parent=0 // pred_region
    %18 = vst [vmem:[%s3] sm:$0xff] 0.0
    %19 = vst [vmem:[%s3 + $0x8] sm:$0xff] 0.0
    %20 = vst [vmem:[%s3 + $0x10] sm:$0xff] 0.0
    %21 = vst [vmem:[%s3 + $0x18] sm:$0xff] 0.0
    %22 = vst [vmem:[%s3 + $0x20] sm:$0xff] 0.0
    %23 = vst [vmem:[%s3 + $0x28] sm:$0xff] 0.0
    %24 = vst [vmem:[%s3 + $0x30] sm:$0xff] 0.0
    %25 = vst [vmem:[%s3 + $0x38] sm:$0xff] 0.0
    %26 = vst [vmem:[%s3 + $0x40] sm:$0xff] 0.0
    %27 = vst [vmem:[%s3 + $0x48] sm:$0xff] 0.0
    %28 = vst [vmem:[%s3 + $0x50] sm:$0xff] 0.0
    %29 = vst [vmem:[%s3 + $0x58] sm:$0xff] 0.0
    %30 = vst [vmem:[%s3 + $0x60] sm:$0xff] 0.0
    %31 = vst [vmem:[%s3 + $0x68] sm:$0xff] 0.0
    %32 = vst [vmem:[%s3 + $0x70] sm:$0xff] 0.0
    %33 = vst [vmem:[%s3 + $0x78] sm:$0xff] 0.0
  $region17: #{gcn_forward.5} parent=0 // pred_fallthru
    _
  %s34 = smul.u32 0, 128
  %v35 = vld [vmem:[%s3] sm:$0xff]
  %v36 = vld [vmem:[%s3 + $0x8] sm:$0xff]
  %v37 = vld [vmem:[%s3 + $0x10] sm:$0xff]
  %v38 = vld [vmem:[%s3 + $0x18] sm:$0xff]
  %v39 = vld [vmem:[%s3 + $0x20] sm:$0xff]
  %v40 = vld [vmem:[%s3 + $0x28] sm:$0xff]
  %v41 = vld [vmem:[%s3 + $0x30] sm:$0xff]
  %v42 = vld [vmem:[%s3 + $0x38] sm:$0xff]
  %v43 = vld [vmem:[%s3 + $0x40] sm:$0xff]
  %v44 = vld [vmem:[%s3 + $0x48] sm:$0xff]
  %v45 = vld [vmem:[%s3 + $0x50] sm:$0xff]
  %v46 = vld [vmem:[%s3 + $0x58] sm:$0xff]
  %v47 = vld [vmem:[%s3 + $0x60] sm:$0xff]
  %v48 = vld [vmem:[%s3 + $0x68] sm:$0xff]
  %v49 = vld [vmem:[%s3 + $0x70] sm:$0xff]
  %v50 = vld [vmem:[%s3 + $0x78] sm:$0xff]
  %v51 = vld [vmem:[%s0] sm:$0xf]
  %v52 = vld [vmem:[%s0 + $0x4] sm:$0xf]
  %v53 = vld [vmem:[%s0 + $0x8] sm:$0xf]
  %v54 = vld [vmem:[%s0 + $0xc] sm:$0xf]
  %v55 = vld [vmem:[%s0 + $0x10] sm:$0xf]
  %v56 = vld [vmem:[%s0 + $0x14] sm:$0xf]
  %v57 = vld [vmem:[%s0 + $0x18] sm:$0xf]
  %v58 = vld [vmem:[%s0 + $0x1c] sm:$0xf]
  %v59 = vld [vmem:[%s0 + $0x20] sm:$0xf]
  %v60 = vld [vmem:[%s0 + $0x24] sm:$0xf]
  %v61 = vld [vmem:[%s0 + $0x28] sm:$0xf]
  %v62 = vld [vmem:[%s0 + $0x2c] sm:$0xf]
  %v63 = vld [vmem:[%s0 + $0x30] sm:$0xf]
  %v64 = vld [vmem:[%s0 + $0x34] sm:$0xf]
  %v65 = vld [vmem:[%s0 + $0x38] sm:$0xf]
  %v66 = vld [vmem:[%s0 + $0x3c] sm:$0xf]
  %s67 = sshra.s32 %s34, 3
  %s68 = sand.u32 %s34, 7
  %s69 = smul.addr %s67, 4
  %s70 = scalar_lea.vmem %s1, %s69
  %v71 = vld [vmem:[%s70] sm:$0xf]
  %v72 = vld [vmem:[%s70 + $0x4] sm:$0xf]
  %v73 = vld [vmem:[%s70 + $0x8] sm:$0xf]
  %v74 = vld [vmem:[%s70 + $0xc] sm:$0xf]
  %v75 = vld [vmem:[%s70 + $0x10] sm:$0xf]
  %v76 = vld [vmem:[%s70 + $0x14] sm:$0xf]
  %v77 = vld [vmem:[%s70 + $0x18] sm:$0xf]
  %v78 = vld [vmem:[%s70 + $0x1c] sm:$0xf]
  %v79 = vld [vmem:[%s70 + $0x20] sm:$0xf]
  %v80 = vld [vmem:[%s70 + $0x24] sm:$0xf]
  %v81 = vld [vmem:[%s70 + $0x28] sm:$0xf]
  %v82 = vld [vmem:[%s70 + $0x2c] sm:$0xf]
  %v83 = vld [vmem:[%s70 + $0x30] sm:$0xf]
  %v84 = vld [vmem:[%s70 + $0x34] sm:$0xf]
  %v85 = vld [vmem:[%s70 + $0x38] sm:$0xf]
  %v86 = vld [vmem:[%s70 + $0x3c] sm:$0xf]
  %v103 = vunpack.c.l.b16 %v51
  %v104 = vunpack.c.l.b16 %v52
  %v105 = vunpack.c.l.b16 %v53
  %v106 = vunpack.c.l.b16 %v54
  %v107 = vunpack.c.l.b16 %v55
  %v108 = vunpack.c.l.b16 %v56
  %v109 = vunpack.c.l.b16 %v57
  %v110 = vunpack.c.l.b16 %v58
  %v111 = vunpack.c.l.b16 %v59
  %v112 = vunpack.c.l.b16 %v60
  %v113 = vunpack.c.l.b16 %v61
  %v114 = vunpack.c.l.b16 %v62
  %v115 = vunpack.c.l.b16 %v63
  %v116 = vunpack.c.l.b16 %v64
  %v117 = vunpack.c.l.b16 %v65
  %v118 = vunpack.c.l.b16 %v66
  %v119 = vpack.c.b16 %v104, %v103
  %v120 = vpack.c.b16 %v106, %v105
  %v121 = vpack.c.b16 %v108, %v107
  %v122 = vpack.c.b16 %v110, %v109
  %v123 = vpack.c.b16 %v112, %v111
  %v124 = vpack.c.b16 %v114, %v113
  %v125 = vpack.c.b16 %v116, %v115
  %v126 = vpack.c.b16 %v118, %v117
  %v151 = vunpack.c.l.b16 %v71
  %v152 = vunpack.c.l.b16 %v72
  %v153 = vunpack.c.l.b16 %v73
  %v154 = vunpack.c.l.b16 %v74
  %v155 = vunpack.c.l.b16 %v75
  %v156 = vunpack.c.l.b16 %v76
  %v157 = vunpack.c.l.b16 %v77
  %v158 = vunpack.c.l.b16 %v78
  %v159 = vunpack.c.l.b16 %v79
  %v160 = vunpack.c.l.b16 %v80
  %v161 = vunpack.c.l.b16 %v81
  %v162 = vunpack.c.l.b16 %v82
  %v163 = vunpack.c.l.b16 %v83
  %v164 = vunpack.c.l.b16 %v84
  %v165 = vunpack.c.l.b16 %v85
  %v166 = vunpack.c.l.b16 %v86
  %v167 = vpack.c.b16 %v152, %v151
  %v168 = vpack.c.b16 %v154, %v153
  %v169 = vpack.c.b16 %v156, %v155
  %v170 = vpack.c.b16 %v158, %v157
  %v171 = vpack.c.b16 %v160, %v159
  %v172 = vpack.c.b16 %v162, %v161
  %v173 = vpack.c.b16 %v164, %v163
  %v174 = vpack.c.b16 %v166, %v165
  %183 = vmatpush.bf16.msra.mxu0 %v174
  %184 = vmatpush.bf16.msra.mxu0 %v173
  %185 = vmatpush.bf16.msra.mxu0 %v172
  %186 = vmatpush.bf16.msra.mxu0 %v171
  %187 = vmatpush.bf16.msra.mxu0 %v170
  %188 = vmatpush.bf16.msra.mxu0 %v169
  %189 = vmatpush.bf16.msra.mxu0 %v168
  %190 = vmatpush.bf16.msra.mxu0 %v167
  %191 = vmatmul.bf16.gmra.mxu0 %v119
  %v192 = vpop.f32.mrf.mxu0
  %v193 = vadd.f32 0.0, %v192
  %v194 = vpop.f32.mrf.mxu0
  %v195 = vadd.f32 0.0, %v194
  %196 = vmatmul.bf16.gmra.mxu0 %v120
  %v197 = vpop.f32.mrf.mxu0
  %v198 = vadd.f32 0.0, %v197
  %v199 = vpop.f32.mrf.mxu0
  %v200 = vadd.f32 0.0, %v199
  %201 = vmatmul.bf16.gmra.mxu0 %v121
  %v202 = vpop.f32.mrf.mxu0
  %v203 = vadd.f32 0.0, %v202
  %v204 = vpop.f32.mrf.mxu0
  %v205 = vadd.f32 0.0, %v204
  %206 = vmatmul.bf16.gmra.mxu0 %v122
  %v207 = vpop.f32.mrf.mxu0
  %v208 = vadd.f32 0.0, %v207
  %v209 = vpop.f32.mrf.mxu0
  %v210 = vadd.f32 0.0, %v209
  %211 = vmatmul.bf16.gmra.mxu0 %v123
  %v212 = vpop.f32.mrf.mxu0
  %v213 = vadd.f32 0.0, %v212
  %v214 = vpop.f32.mrf.mxu0
  %v215 = vadd.f32 0.0, %v214
  %216 = vmatmul.bf16.gmra.mxu0 %v124
  %v217 = vpop.f32.mrf.mxu0
  %v218 = vadd.f32 0.0, %v217
  %v219 = vpop.f32.mrf.mxu0
  %v220 = vadd.f32 0.0, %v219
  %221 = vmatmul.bf16.gmra.mxu0 %v125
  %v222 = vpop.f32.mrf.mxu0
  %v223 = vadd.f32 0.0, %v222
  %v224 = vpop.f32.mrf.mxu0
  %v225 = vadd.f32 0.0, %v224
  %226 = vmatmul.bf16.gmra.mxu0 %v126
  %v227 = vpop.f32.mrf.mxu0
  %v228 = vadd.f32 0.0, %v227
  %v229 = vpop.f32.mrf.mxu0
  %v230 = vadd.f32 0.0, %v229
  %231 = vdwg.mxu0
  %v232 = vadd.f32 %v35, %v193
  %v233 = vadd.f32 %v36, %v195
  %v234 = vadd.f32 %v37, %v198
  %v235 = vadd.f32 %v38, %v200
  %v236 = vadd.f32 %v39, %v203
  %v237 = vadd.f32 %v40, %v205
  %v238 = vadd.f32 %v41, %v208
  %v239 = vadd.f32 %v42, %v210
  %v240 = vadd.f32 %v43, %v213
  %v241 = vadd.f32 %v44, %v215
  %v242 = vadd.f32 %v45, %v218
  %v243 = vadd.f32 %v46, %v220
  %v244 = vadd.f32 %v47, %v223
  %v245 = vadd.f32 %v48, %v225
  %v246 = vadd.f32 %v49, %v228
  %v247 = vadd.f32 %v50, %v230
  %248 = vst [vmem:[%s3] sm:$0xff] %v232
  %249 = vst [vmem:[%s3 + $0x8] sm:$0xff] %v233
  %250 = vst [vmem:[%s3 + $0x10] sm:$0xff] %v234
  %251 = vst [vmem:[%s3 + $0x18] sm:$0xff] %v235
  %252 = vst [vmem:[%s3 + $0x20] sm:$0xff] %v236
  %253 = vst [vmem:[%s3 + $0x28] sm:$0xff] %v237
  %254 = vst [vmem:[%s3 + $0x30] sm:$0xff] %v238
  %255 = vst [vmem:[%s3 + $0x38] sm:$0xff] %v239
  %256 = vst [vmem:[%s3 + $0x40] sm:$0xff] %v240
  %257 = vst [vmem:[%s3 + $0x48] sm:$0xff] %v241
  %258 = vst [vmem:[%s3 + $0x50] sm:$0xff] %v242
  %259 = vst [vmem:[%s3 + $0x58] sm:$0xff] %v243
  %260 = vst [vmem:[%s3 + $0x60] sm:$0xff] %v244
  %261 = vst [vmem:[%s3 + $0x68] sm:$0xff] %v245
  %262 = vst [vmem:[%s3 + $0x70] sm:$0xff] %v246
  %263 = vst [vmem:[%s3 + $0x78] sm:$0xff] %v247
  // Predicated region
  $region18: #{gcn_forward.5} parent=0 // pred_check
    %p264 = pneg %p14
  $region19: #{gcn_forward.5} parent=0 // pred_check_branch
    %266 = sbr.rel (%p264) target = $region21
  $region20: #{gcn_forward.5} parent=0 // pred_region
    %v267 = vld [vmem:[%s3] sm:$0xff]
    %v268 = vld [vmem:[%s3 + $0x8] sm:$0xff]
    %v269 = vld [vmem:[%s3 + $0x10] sm:$0xff]
    %v270 = vld [vmem:[%s3 + $0x18] sm:$0xff]
    %v271 = vld [vmem:[%s3 + $0x20] sm:$0xff]
    %v272 = vld [vmem:[%s3 + $0x28] sm:$0xff]
    %v273 = vld [vmem:[%s3 + $0x30] sm:$0xff]
    %v274 = vld [vmem:[%s3 + $0x38] sm:$0xff]
    %v275 = vld [vmem:[%s3 + $0x40] sm:$0xff]
    %v276 = vld [vmem:[%s3 + $0x48] sm:$0xff]
    %v277 = vld [vmem:[%s3 + $0x50] sm:$0xff]
    %v278 = vld [vmem:[%s3 + $0x58] sm:$0xff]
    %v279 = vld [vmem:[%s3 + $0x60] sm:$0xff]
    %v280 = vld [vmem:[%s3 + $0x68] sm:$0xff]
    %v281 = vld [vmem:[%s3 + $0x70] sm:$0xff]
    %v282 = vld [vmem:[%s3 + $0x78] sm:$0xff]
    %v283 = vld [vmem:[%s2] sm:$0x1]
    %v285 = vperm.slane %v283, 0
    %v287 = vadd.f32 %v267, %v285
    %v288 = vadd.f32 %v268, %v285
    %v289 = vadd.f32 %v269, %v285
    %v290 = vadd.f32 %v270, %v285
    %v291 = vadd.f32 %v271, %v285
    %v292 = vadd.f32 %v272, %v285
    %v293 = vadd.f32 %v273, %v285
    %v294 = vadd.f32 %v274, %v285
    %v295 = vadd.f32 %v275, %v285
    %v296 = vadd.f32 %v276, %v285
    %v297 = vadd.f32 %v277, %v285
    %v298 = vadd.f32 %v278, %v285
    %v299 = vadd.f32 %v279, %v285
    %v300 = vadd.f32 %v280, %v285
    %v301 = vadd.f32 %v281, %v285
    %v302 = vadd.f32 %v282, %v285
    %v303 = vlaneseq
    %v304 = vand.u32 %v303, 127
    %vm305 = vcmp.lt.s32.totalorder %v304, 4
    %v306 = vsel %vm305, %v287, -inf
    %v307 = vsel %vm305, %v288, -inf
    %v308 = vsel %vm305, %v289, -inf
    %v309 = vsel %vm305, %v290, -inf
    %v310 = vsel %vm305, %v291, -inf
    %v311 = vsel %vm305, %v292, -inf
    %v312 = vsel %vm305, %v293, -inf
    %v313 = vsel %vm305, %v294, -inf
    %v314 = vsel %vm305, %v295, -inf
    %v315 = vsel %vm305, %v296, -inf
    %v316 = vsel %vm305, %v297, -inf
    %v317 = vsel %vm305, %v298, -inf
    %v318 = vsel %vm305, %v299, -inf
    %v319 = vsel %vm305, %v300, -inf
    %v320 = vsel %vm305, %v301, -inf
    %v321 = vsel %vm305, %v302, -inf
    %322 = vmax.xlane.f32.xlu0 %v306
    %v323 = vpop.xlane.xlu0 %322
    %324 = vmax.xlane.f32.xlu0 %v307
    %v325 = vpop.xlane.xlu0 %324
    %326 = vmax.xlane.f32.xlu0 %v308
    %v327 = vpop.xlane.xlu0 %326
    %328 = vmax.xlane.f32.xlu0 %v309
    %v329 = vpop.xlane.xlu0 %328
    %330 = vmax.xlane.f32.xlu0 %v310
    %v331 = vpop.xlane.xlu0 %330
    %332 = vmax.xlane.f32.xlu0 %v311
    %v333 = vpop.xlane.xlu0 %332
    %334 = vmax.xlane.f32.xlu0 %v312
    %v335 = vpop.xlane.xlu0 %334
    %336 = vmax.xlane.f32.xlu0 %v313
    %v337 = vpop.xlane.xlu0 %336
    %338 = vmax.xlane.f32.xlu0 %v314
    %v339 = vpop.xlane.xlu0 %338
    %340 = vmax.xlane.f32.xlu0 %v315
    %v341 = vpop.xlane.xlu0 %340
    %342 = vmax.xlane.f32.xlu0 %v316
    %v343 = vpop.xlane.xlu0 %342
    %344 = vmax.xlane.f32.xlu0 %v317
    %v345 = vpop.xlane.xlu0 %344
    %346 = vmax.xlane.f32.xlu0 %v318
    %v347 = vpop.xlane.xlu0 %346
    %348 = vmax.xlane.f32.xlu0 %v319
    %v349 = vpop.xlane.xlu0 %348
    %350 = vmax.xlane.f32.xlu0 %v320
    %v351 = vpop.xlane.xlu0 %350
    %352 = vmax.xlane.f32.xlu0 %v321
    %v353 = vpop.xlane.xlu0 %352
    %v354 = vsub.f32 %v306, %v323
    %v355 = vsub.f32 %v307, %v325
    %v356 = vsub.f32 %v308, %v327
    %v357 = vsub.f32 %v309, %v329
    %v358 = vsub.f32 %v310, %v331
    %v359 = vsub.f32 %v311, %v333
    %v360 = vsub.f32 %v312, %v335
    %v361 = vsub.f32 %v313, %v337
    %v362 = vsub.f32 %v314, %v339
    %v363 = vsub.f32 %v315, %v341
    %v364 = vsub.f32 %v316, %v343
    %v365 = vsub.f32 %v317, %v345
    %v366 = vsub.f32 %v318, %v347
    %v367 = vsub.f32 %v319, %v349
    %v368 = vsub.f32 %v320, %v351
    %v369 = vsub.f32 %v321, %v353
    %v370 = vmul.f32 %v354, 1.442695
    %v371 = vpow.pop %v370
    %v372 = vmul.f32 %v355, 1.442695
    %v373 = vpow.pop %v372
    %v374 = vmul.f32 %v356, 1.442695
    %v375 = vpow.pop %v374
    %v376 = vmul.f32 %v357, 1.442695
    %v377 = vpow.pop %v376
    %v378 = vmul.f32 %v358, 1.442695
    %v379 = vpow.pop %v378
    %v380 = vmul.f32 %v359, 1.442695
    %v381 = vpow.pop %v380
    %v382 = vmul.f32 %v360, 1.442695
    %v383 = vpow.pop %v382
    %v384 = vmul.f32 %v361, 1.442695
    %v385 = vpow.pop %v384
    %v386 = vmul.f32 %v362, 1.442695
    %v387 = vpow.pop %v386
    %v388 = vmul.f32 %v363, 1.442695
    %v389 = vpow.pop %v388
    %v390 = vmul.f32 %v364, 1.442695
    %v391 = vpow.pop %v390
    %v392 = vmul.f32 %v365, 1.442695
    %v393 = vpow.pop %v392
    %v394 = vmul.f32 %v366, 1.442695
    %v395 = vpow.pop %v394
    %v396 = vmul.f32 %v367, 1.442695
    %v397 = vpow.pop %v396
    %v398 = vmul.f32 %v368, 1.442695
    %v399 = vpow.pop %v398
    %v400 = vmul.f32 %v369, 1.442695
    %v401 = vpow.pop %v400
    %402 = vadd.xlane.f32.xlu0 %v371
    %v403 = vpop.xlane.xlu0 %402
    %404 = vadd.xlane.f32.xlu0 %v373
    %v405 = vpop.xlane.xlu0 %404
    %406 = vadd.xlane.f32.xlu0 %v375
    %v407 = vpop.xlane.xlu0 %406
    %408 = vadd.xlane.f32.xlu0 %v377
    %v409 = vpop.xlane.xlu0 %408
    %410 = vadd.xlane.f32.xlu0 %v379
    %v411 = vpop.xlane.xlu0 %410
    %412 = vadd.xlane.f32.xlu0 %v381
    %v413 = vpop.xlane.xlu0 %412
    %414 = vadd.xlane.f32.xlu0 %v383
    %v415 = vpop.xlane.xlu0 %414
    %416 = vadd.xlane.f32.xlu0 %v385
    %v417 = vpop.xlane.xlu0 %416
    %418 = vadd.xlane.f32.xlu0 %v387
    %v419 = vpop.xlane.xlu0 %418
    %420 = vadd.xlane.f32.xlu0 %v389
    %v421 = vpop.xlane.xlu0 %420
    %422 = vadd.xlane.f32.xlu0 %v391
    %v423 = vpop.xlane.xlu0 %422
    %424 = vadd.xlane.f32.xlu0 %v393
    %v425 = vpop.xlane.xlu0 %424
    %426 = vadd.xlane.f32.xlu0 %v395
    %v427 = vpop.xlane.xlu0 %426
    %428 = vadd.xlane.f32.xlu0 %v397
    %v429 = vpop.xlane.xlu0 %428
    %430 = vadd.xlane.f32.xlu0 %v399
    %v431 = vpop.xlane.xlu0 %430
    %432 = vadd.xlane.f32.xlu0 %v401
    %v433 = vpop.xlane.xlu0 %432
    %v434 = vlog2.pop %v403
    %v435 = vmul.f32 %v434, 0.6931472
    %v436 = vlog2.pop %v405
    %v437 = vmul.f32 %v436, 0.6931472
    %v438 = vlog2.pop %v407
    %v439 = vmul.f32 %v438, 0.6931472
    %v440 = vlog2.pop %v409
    %v441 = vmul.f32 %v440, 0.6931472
    %v442 = vlog2.pop %v411
    %v443 = vmul.f32 %v442, 0.6931472
    %v444 = vlog2.pop %v413
    %v445 = vmul.f32 %v444, 0.6931472
    %v446 = vlog2.pop %v415
    %v447 = vmul.f32 %v446, 0.6931472
    %v448 = vlog2.pop %v417
    %v449 = vmul.f32 %v448, 0.6931472
    %v450 = vlog2.pop %v419
    %v451 = vmul.f32 %v450, 0.6931472
    %v452 = vlog2.pop %v421
    %v453 = vmul.f32 %v452, 0.6931472
    %v454 = vlog2.pop %v423
    %v455 = vmul.f32 %v454, 0.6931472
    %v456 = vlog2.pop %v425
    %v457 = vmul.f32 %v456, 0.6931472
    %v458 = vlog2.pop %v427
    %v459 = vmul.f32 %v458, 0.6931472
    %v460 = vlog2.pop %v429
    %v461 = vmul.f32 %v460, 0.6931472
    %v462 = vlog2.pop %v431
    %v463 = vmul.f32 %v462, 0.6931472
    %v464 = vlog2.pop %v433
    %v465 = vmul.f32 %v464, 0.6931472
    %v466 = vsub.f32 %v354, %v435
    %v467 = vsub.f32 %v355, %v437
    %v468 = vsub.f32 %v356, %v439
    %v469 = vsub.f32 %v357, %v441
    %v470 = vsub.f32 %v358, %v443
    %v471 = vsub.f32 %v359, %v445
    %v472 = vsub.f32 %v360, %v447
    %v473 = vsub.f32 %v361, %v449
    %v474 = vsub.f32 %v362, %v451
    %v475 = vsub.f32 %v363, %v453
    %v476 = vsub.f32 %v364, %v455
    %v477 = vsub.f32 %v365, %v457
    %v478 = vsub.f32 %v366, %v459
    %v479 = vsub.f32 %v367, %v461
    %v480 = vsub.f32 %v368, %v463
    %v481 = vsub.f32 %v369, %v465
    %482 = vst [vmem:[%s3] sm:$0xff] %v466
    %483 = vst [vmem:[%s3 + $0x8] sm:$0xff] %v467
    %484 = vst [vmem:[%s3 + $0x10] sm:$0xff] %v468
    %485 = vst [vmem:[%s3 + $0x18] sm:$0xff] %v469
    %486 = vst [vmem:[%s3 + $0x20] sm:$0xff] %v470
    %487 = vst [vmem:[%s3 + $0x28] sm:$0xff] %v471
    %488 = vst [vmem:[%s3 + $0x30] sm:$0xff] %v472
    %489 = vst [vmem:[%s3 + $0x38] sm:$0xff] %v473
    %490 = vst [vmem:[%s3 + $0x40] sm:$0xff] %v474
    %491 = vst [vmem:[%s3 + $0x48] sm:$0xff] %v475
    %492 = vst [vmem:[%s3 + $0x50] sm:$0xff] %v476
    %493 = vst [vmem:[%s3 + $0x58] sm:$0xff] %v477
    %494 = vst [vmem:[%s3 + $0x60] sm:$0xff] %v478
    %495 = vst [vmem:[%s3 + $0x68] sm:$0xff] %v479
    %496 = vst [vmem:[%s3 + $0x70] sm:$0xff] %v480
    %497 = vst [vmem:[%s3 + $0x78] sm:$0xff] %v481
  $region21: #{gcn_forward.5} parent=0 // pred_fallthru
    _
  // Predicated region
  $region22: #{gcn_forward.5} parent=0 // pred_check
    _
  $region23: #{gcn_forward.5} parent=0 // pred_check_branch
    %499 = sbr.rel (0) target = $region25
  $region24: #{gcn_forward.5} parent=0 // pred_region
    _
  $region25: #{gcn_forward.5} parent=0 // pred_fallthru
    _
  // Predicated region
  $region26: #{gcn_forward.5} parent=0 // pred_check
    _
  $region27: #{gcn_forward.5} parent=0 // pred_check_branch
    %501 = sbr.rel (0) target = $region29
  $region28: #{gcn_forward.5} parent=0 // pred_region
    _
  $region29: #{gcn_forward.5} parent=0 // pred_fallthru
    _

</llo_original>
